<compile_context>
chip_gen: v7x
topology: tpu7x:2x2x1
jax: 0.10.0
libtpu: 0.0.40
codegen_flags: <defaults>
</compile_context>

<pallas_src>
import functools

import jax
import jax.numpy as jnp
from jax import lax
from jax.experimental import pallas as pl
from jax.experimental.pallas import tpu as pltpu

LANE = 128
SUBLANE = 8


def _round_up(n, m):
    return ((n + m - 1) // m) * m


def _cdiv(a, b):
    return -(-a // b)


# ----------------------------------------------------------------------------
# Kernel
# ----------------------------------------------------------------------------
def _coupling_kernel(x_ref, w1_ref, b1_ref, w2_ref, b2_ref, w3_ref, b3_ref,
                     y_ref, logdet_ref, *, reverse):
    hp = x_ref.shape[1] // 2                      # lane-aligned half (static)
    mm = w1_ref.dtype                             # matmul operand dtype

    x = x_ref[...]                                # [TB, 2*hp] f32
    x1 = x[:, :hp]                                # lane-tile-aligned views
    x2 = x[:, hp:]

    # MLP: Linear -> ReLU -> Linear -> ReLU -> Linear (last layer fused s|t).
    # Accumulation is f32; operands may be bf16 for v6e/v7x MXU throughput.
    h1 = jnp.dot(x1.astype(mm), w1_ref[...],
                 preferred_element_type=jnp.float32) + b1_ref[...]
    h1 = jnp.maximum(h1, 0.0)
    h2 = jnp.dot(h1.astype(mm), w2_ref[...],
                 preferred_element_type=jnp.float32) + b2_ref[...]
    h2 = jnp.maximum(h2, 0.0)
    st = jnp.dot(h2.astype(mm), w3_ref[...],
                 preferred_element_type=jnp.float32) + b3_ref[...]

    s = jnp.tanh(st[:, :hp])                      # padded cols -> tanh(0) = 0
    t = st[:, hp:]

    if not reverse:                               # static Python bool
        y2 = x2 * jnp.exp(s) + t
        ld = jnp.sum(s, axis=1, keepdims=True)
    else:
        y2 = (x2 - t) * jnp.exp(-s)
        ld = -jnp.sum(s, axis=1, keepdims=True)

    y_ref[:, :hp] = x1                            # pass-through half
    y_ref[:, hp:] = y2
    # Narrow (TB, 8) log_det slab; wrapper reads lane 0.
    logdet_ref[...] = jnp.broadcast_to(ld, logdet_ref.shape)


# ----------------------------------------------------------------------------
# Parameter handling
# ----------------------------------------------------------------------------
def init_params(key, dim, hidden_dim=64):
    """Logical params, PyTorch Linear weights pre-transposed to [in, out]."""
    half = dim // 2
    k1, k2, k3, k4 = jax.random.split(key, 4)
    w1 = jax.random.normal(k1, (half, hidden_dim), jnp.float32) * 0.1
    b1 = jax.random.normal(k2, (1, hidden_dim), jnp.float32) * 0.1
    w2 = jax.random.normal(k3, (hidden_dim, hidden_dim), jnp.float32) * 0.1
    b2 = jax.random.normal(k4, (1, hidden_dim), jnp.float32) * 0.1
    # Last layer zero-initialized, exactly as in the PyTorch module.
    w3 = jnp.zeros((hidden_dim, half * 2), jnp.float32)
    b3 = jnp.zeros((1, half * 2), jnp.float32)
    return dict(w1=w1, b1=b1, w2=w2, b2=b2, w3=w3, b3=b3)


def prepare_params(params, dim, matmul_dtype=jnp.float32):
    """One-time: zero-pad to lane multiples, fuse the last layer into a single
    [hid_p, 2*half_p] slab (s half | t half, each lane-tile aligned), and
    optionally cast weights to bf16 for the MXU.  Zero padding keeps the math
    exact (padded s columns are tanh(0) = 0)."""
    half = dim // 2
    hidden = params["w1"].shape[1]
    half_p = _round_up(half, LANE)
    hid_p = _round_up(hidden, LANE)

    def pad2(a, rows, cols):
        return jnp.pad(a, ((0, rows - a.shape[0]), (0, cols - a.shape[1])))

    w3, b3 = params["w3"], params["b3"]
    w3_f = jnp.concatenate([pad2(w3[:, :half], hidden, half_p),
                            pad2(w3[:, half:], hidden, half_p)], axis=1)
    w3_f = pad2(w3_f, hid_p, 2 * half_p)
    b3_f = jnp.concatenate([pad2(b3[:, :half], 1, half_p),
                            pad2(b3[:, half:], 1, half_p)], axis=1)

    return dict(
        w1=pad2(params["w1"], half_p, hid_p).astype(matmul_dtype),
        b1=pad2(params["b1"], 1, hid_p),
        w2=pad2(params["w2"], hid_p, hid_p).astype(matmul_dtype),
        b2=pad2(params["b2"], 1, hid_p),
        w3=w3_f.astype(matmul_dtype),
        b3=b3_f,
    )


def _default_block_batch(half_p, hid_p):
    # Per-row f32 bytes: streamed x/y tiles (double-buffered) + f32 intermediates.
    stream = 2 * (2 * half_p) * 4 * 2
    interm = (2 * hid_p + 4 * half_p) * 4
    budget = 10 * 1024 * 1024          # headroom for weights within v7x's VMEM
    tb = budget // (stream + interm)
    return max(SUBLANE, min(2048, (tb // SUBLANE) * SUBLANE))


# ----------------------------------------------------------------------------
# Wrapper
# ----------------------------------------------------------------------------
def coupling_layer(x, prepared, reverse=False, block_batch=None):
    """x: [B, dim] float32 (dim even). prepared: output of prepare_params."""
    B, dim = x.shape
    assert dim % 2 == 0, "CouplingLayer requires an even feature dimension"
    half = dim // 2
    half_p, hid_p = prepared["w1"].shape
    dim_p = 2 * half_p

    if block_batch is None:
        block_batch = _default_block_batch(half_p, hid_p)

    # Balanced batch tiling: caps padding at < 8 rows per tile.
    n_tiles = max(1, _cdiv(B, block_batch))
    tb = _round_up(_cdiv(B, n_tiles), SUBLANE)
    b_pad = n_tiles * tb

    if half == half_p:
        xp = x                                       # fast path: no feature pad
    else:
        x1 = x[:, :half]
        x2 = x[:, half:]
        xp = jnp.concatenate(
            [jnp.pad(x1, ((0, 0), (0, half_p - half))),
             jnp.pad(x2, ((0, 0), (0, half_p - half)))], axis=1)
    if b_pad != B:
        xp = jnp.pad(xp, ((0, b_pad - B), (0, 0)))

    kernel = functools.partial(_coupling_kernel, reverse=reverse)

    def w_spec(shape):
        return pl.BlockSpec(shape, lambda i: (0, 0))  # resident across grid

    yp, ldp = pl.pallas_call(
        kernel,
        out_shape=(
            jax.ShapeDtypeStruct((b_pad, dim_p), jnp.float32),
            jax.ShapeDtypeStruct((b_pad, SUBLANE), jnp.float32),
        ),
        grid=(b_pad // tb,),
        in_specs=[
            pl.BlockSpec((tb, dim_p), lambda i: (i, 0)),
            w_spec((half_p, hid_p)), w_spec((1, hid_p)),
            w_spec((hid_p, hid_p)), w_spec((1, hid_p)),
            w_spec((hid_p, 2 * half_p)), w_spec((1, 2 * half_p)),
        ],
        out_specs=(
            pl.BlockSpec((tb, dim_p), lambda i: (i, 0)),
            pl.BlockSpec((tb, SUBLANE), lambda i: (i, 0)),
        ),
        compiler_params=pltpu.CompilerParams(
            dimension_semantics=("parallel",),
            vmem_limit_bytes=48 * 1024 * 1024),
    )(xp, prepared["w1"], prepared["b1"], prepared["w2"], prepared["b2"],
      prepared["w3"], prepared["b3"])

    log_det = ldp[:B, 0]
    if half == half_p:
        y = yp if b_pad == B else yp[:B]
    else:
        y = jnp.concatenate([yp[:B, :half], yp[:B, half_p:half_p + half]],
                            axis=1)
    return y, log_det


# ----------------------------------------------------------------------------
# Pure-JAX reference (matches the PyTorch module)
# ----------------------------------------------------------------------------
def coupling_layer_ref(x, params, reverse=False):
    half = x.shape[1] // 2
    x1, x2 = x[:, :half], x[:, half:]
    hi = lax.Precision.HIGHEST
    h = jnp.maximum(jnp.dot(x1, params["w1"], precision=hi) + params["b1"], 0.0)
    h = jnp.maximum(jnp.dot(h, params["w2"], precision=hi) + params["b2"], 0.0)
    st = jnp.dot(h, params["w3"], precision=hi) + params["b3"]
    s = jnp.tanh(st[:, :half])
    t = st[:, half:]
    if not reverse:
        y2 = x2 * jnp.exp(s) + t
        log_det = s.sum(axis=1)
    else:
        y2 = (x2 - t) * jnp.exp(-s)
        log_det = -s.sum(axis=1)
    return jnp.concatenate([x1, y2], axis=1), log_det


def _check(a, b, atol, msg):
    assert jnp.allclose(a, b, atol=atol), msg


if __name__ == "__main__":
    key = jax.random.PRNGKey(0)
    kx, kp, kw, kb, kx2, kp2, kw2, kb2 = jax.random.split(key, 8)

    run = jax.jit(coupling_layer, static_argnames=("reverse", "block_batch"))

    # ---- Test 1: small unaligned dim, zero-init last layer (as in PyTorch) ----
    B, DIM, HIDDEN = 8, 8, 32
    x = jax.random.normal(kx, (B, DIM), jnp.float32)
    params = init_params(kp, DIM, HIDDEN)
    prepared = prepare_params(params, DIM)
    y, ld = run(x, prepared, reverse=False)
    jax.block_until_ready((y, ld))
    y_ref, ld_ref = coupling_layer_ref(x, params, reverse=False)
    _check(y, y_ref, 2e-3, "output mismatch (zero-init)")
    _check(ld, ld_ref, 2e-3, "log_det mismatch (zero-init)")

    # ---- Test 2: non-trivial last layer, forward + reverse (f32) ----
    half = DIM // 2
    params_t = dict(params,
                    w3=jax.random.normal(kw, (HIDDEN, 2 * half), jnp.float32) * 0.1,
                    b3=jax.random.normal(kb, (1, 2 * half), jnp.float32) * 0.1)
    prepared_t = prepare_params(params_t, DIM)

    yf, ldf = run(x, prepared_t, reverse=False)
    yf_ref, ldf_ref = coupling_layer_ref(x, params_t, reverse=False)
    _check(yf, yf_ref, 2e-3, "forward output mismatch")
    _check(ldf, ldf_ref, 2e-3, "forward log_det mismatch")

    yr, ldr = run(yf, prepared_t, reverse=True)
    yr_ref, ldr_ref = coupling_layer_ref(yf, params_t, reverse=True)
    _check(yr, yr_ref, 2e-3, "reverse output mismatch")
    _check(ldr, ldr_ref, 2e-3, "reverse log_det mismatch")
    _check(yr, x, 1e-4, "reverse did not invert forward")

    # ---- Test 3: bf16 MXU path (v6e/v7x feedback), looser tolerance ----
    prepared_bf = prepare_params(params_t, DIM, matmul_dtype=jnp.bfloat16)
    yb, ldb = run(x, prepared_bf, reverse=False)
    _check(yb, yf_ref, 3e-2, "bf16 forward output mismatch")
    _check(ldb, ldf_ref, 3e-2, "bf16 forward log_det mismatch")

    # ---- Test 4: lane-aligned half (half % 128 == 0) -> zero-copy fast path ----
    B2, DIM2, HIDDEN2 = 16, 256, 32
    xa = jax.random.normal(kx2, (B2, DIM2), jnp.float32)
    half2 = DIM2 // 2
    params_a = init_params(kp2, DIM2, HIDDEN2)
    params_a = dict(params_a,
                    w3=jax.random.normal(kw2, (HIDDEN2, 2 * half2), jnp.float32) * 0.05,
                    b3=jax.random.normal(kb2, (1, 2 * half2), jnp.float32) * 0.05)
    prepared_a = prepare_params(params_a, DIM2)
    ya, lda = run(xa, prepared_a, reverse=False)
    ya_ref, lda_ref = coupling_layer_ref(xa, params_a, reverse=False)
    _check(ya, ya_ref, 5e-3, "aligned forward output mismatch")
    _check(lda, lda_ref, 2e-2, "aligned forward log_det mismatch")
    yar, ldar = run(ya, prepared_a, reverse=True)
    _check(yar, xa, 1e-4, "aligned reverse did not invert forward")

    jax.block_until_ready((yf, ldf, yr, ldr, yb, ldb, ya, lda, yar, ldar))
    print("KERNEL_OK")
</pallas_src>

<mosaic_0001>
module attributes {stable_mosaic.version = 11 : i64} {
  func.func @_coupling_kernel(%arg0: i32, %arg1: memref<8x256xf32, #tpu.memory_space<vmem>>, %arg2: memref<128x128xf32, #tpu.memory_space<vmem>>, %arg3: memref<1x128xf32, #tpu.memory_space<vmem>>, %arg4: memref<128x128xf32, #tpu.memory_space<vmem>>, %arg5: memref<1x128xf32, #tpu.memory_space<vmem>>, %arg6: memref<128x256xf32, #tpu.memory_space<vmem>>, %arg7: memref<1x256xf32, #tpu.memory_space<vmem>>, %arg8: memref<8x256xf32, #tpu.memory_space<vmem>>, %arg9: memref<8x8xf32, #tpu.memory_space<vmem>>) attributes {dimension_semantics = [#tpu.dimension_semantics<parallel>], iteration_bounds = array<i64: 1>, scalar_prefetch = 0 : i64, scratch_operands = 0 : i64, tpu.core_type = #tpu.core_type<tc>, window_params = [{transform_indices = @transform_0, window_bounds = array<i64: 8, 256>}, {pipeline_mode = #tpu.pipeline_mode<synchronous>, transform_indices = @transform_1, window_bounds = array<i64: 128, 128>}, {pipeline_mode = #tpu.pipeline_mode<synchronous>, transform_indices = @transform_2, window_bounds = array<i64: 1, 128>}, {pipeline_mode = #tpu.pipeline_mode<synchronous>, transform_indices = @transform_3, window_bounds = array<i64: 128, 128>}, {pipeline_mode = #tpu.pipeline_mode<synchronous>, transform_indices = @transform_4, window_bounds = array<i64: 1, 128>}, {pipeline_mode = #tpu.pipeline_mode<synchronous>, transform_indices = @transform_5, window_bounds = array<i64: 128, 256>}, {pipeline_mode = #tpu.pipeline_mode<synchronous>, transform_indices = @transform_6, window_bounds = array<i64: 1, 256>}, {transform_indices = @transform_7, window_bounds = array<i64: 8, 256>}, {transform_indices = @transform_8, window_bounds = array<i64: 8, 8>}]} {
    %c0 = arith.constant 0 : index
    %c0_0 = arith.constant 0 : index
    %0 = vector.load %arg1[%c0, %c0_0] : memref<8x256xf32, #tpu.memory_space<vmem>>, vector<8x256xf32>
    %1 = vector.extract_strided_slice %0 {offsets = [0, 0], sizes = [8, 128], strides = [1, 1]} : vector<8x256xf32> to vector<8x128xf32>
    %2 = vector.extract_strided_slice %0 {offsets = [0, 128], sizes = [8, 128], strides = [1, 1]} : vector<8x256xf32> to vector<8x128xf32>
    %c0_1 = arith.constant 0 : index
    %c0_2 = arith.constant 0 : index
    %3 = vector.load %arg2[%c0_1, %c0_2] : memref<128x128xf32, #tpu.memory_space<vmem>>, vector<128x128xf32>
    %cst = arith.constant dense<0.000000e+00> : vector<8x128xf32>
    %4 = tpu.matmul %1, %3, %cst {dimension_numbers = #tpu.dot_dimension_numbers<[1], [0], [0], [1], [0, 0, 1, 1], [], []>} : vector<8x128xf32>, vector<128x128xf32>, vector<8x128xf32> -> vector<8x128xf32>
    %c0_3 = arith.constant 0 : index
    %c0_4 = arith.constant 0 : index
    %5 = vector.load %arg3[%c0_3, %c0_4] : memref<1x128xf32, #tpu.memory_space<vmem>>, vector<1x128xf32>
    %6 = vector.broadcast %5 : vector<1x128xf32> to vector<8x128xf32>
    %7 = arith.addf %4, %6 : vector<8x128xf32>
    %cst_5 = arith.constant 0.000000e+00 : f32
    %8 = vector.broadcast %cst_5 : f32 to vector<8x128xf32>
    %9 = arith.maximumf %7, %8 : vector<8x128xf32>
    %c0_6 = arith.constant 0 : index
    %c0_7 = arith.constant 0 : index
    %10 = vector.load %arg4[%c0_6, %c0_7] : memref<128x128xf32, #tpu.memory_space<vmem>>, vector<128x128xf32>
    %cst_8 = arith.constant dense<0.000000e+00> : vector<8x128xf32>
    %11 = tpu.matmul %9, %10, %cst_8 {dimension_numbers = #tpu.dot_dimension_numbers<[1], [0], [0], [1], [0, 0, 1, 1], [], []>} : vector<8x128xf32>, vector<128x128xf32>, vector<8x128xf32> -> vector<8x128xf32>
    %c0_9 = arith.constant 0 : index
    %c0_10 = arith.constant 0 : index
    %12 = vector.load %arg5[%c0_9, %c0_10] : memref<1x128xf32, #tpu.memory_space<vmem>>, vector<1x128xf32>
    %13 = vector.broadcast %12 : vector<1x128xf32> to vector<8x128xf32>
    %14 = arith.addf %11, %13 : vector<8x128xf32>
    %cst_11 = arith.constant 0.000000e+00 : f32
    %15 = vector.broadcast %cst_11 : f32 to vector<8x128xf32>
    %16 = arith.maximumf %14, %15 : vector<8x128xf32>
    %c0_12 = arith.constant 0 : index
    %c0_13 = arith.constant 0 : index
    %17 = vector.load %arg6[%c0_12, %c0_13] : memref<128x256xf32, #tpu.memory_space<vmem>>, vector<128x256xf32>
    %cst_14 = arith.constant dense<0.000000e+00> : vector<8x256xf32>
    %18 = tpu.matmul %16, %17, %cst_14 {dimension_numbers = #tpu.dot_dimension_numbers<[1], [0], [0], [1], [0, 0, 1, 1], [], []>} : vector<8x128xf32>, vector<128x256xf32>, vector<8x256xf32> -> vector<8x256xf32>
    %c0_15 = arith.constant 0 : index
    %c0_16 = arith.constant 0 : index
    %19 = vector.load %arg7[%c0_15, %c0_16] : memref<1x256xf32, #tpu.memory_space<vmem>>, vector<1x256xf32>
    %20 = vector.broadcast %19 : vector<1x256xf32> to vector<8x256xf32>
    %21 = arith.addf %18, %20 : vector<8x256xf32>
    %22 = vector.extract_strided_slice %21 {offsets = [0, 0], sizes = [8, 128], strides = [1, 1]} : vector<8x256xf32> to vector<8x128xf32>
    %23 = math.tanh %22 : vector<8x128xf32>
    %24 = vector.extract_strided_slice %21 {offsets = [0, 128], sizes = [8, 128], strides = [1, 1]} : vector<8x256xf32> to vector<8x128xf32>
    %25 = math.exp %23 : vector<8x128xf32>
    %26 = arith.mulf %2, %25 : vector<8x128xf32>
    %27 = arith.addf %26, %24 : vector<8x128xf32>
    %cst_17 = arith.constant dense<0.000000e+00> : vector<8xf32>
    %28 = vector.multi_reduction <add>, %23, %cst_17 [1] : vector<8x128xf32> to vector<8xf32>
    %29 = vector.shape_cast %28 : vector<8xf32> to vector<8x1xf32>
    %c0_18 = arith.constant 0 : index
    %c0_19 = arith.constant 0 : index
    %30 = vector.load %arg8[%c0_18, %c0_19] : memref<8x256xf32, #tpu.memory_space<vmem>>, vector<8x128xf32>
    tpu.vector_store %arg8[%c0_18, %c0_19], %1 {strides = array<i32>} : memref<8x256xf32, #tpu.memory_space<vmem>>, vector<8x128xf32>,
    %c0_20 = arith.constant 0 : index
    %c128 = arith.constant 128 : index
    %31 = vector.load %arg8[%c0_20, %c128] : memref<8x256xf32, #tpu.memory_space<vmem>>, vector<8x128xf32>
    tpu.vector_store %arg8[%c0_20, %c128], %27 {strides = array<i32>} : memref<8x256xf32, #tpu.memory_space<vmem>>, vector<8x128xf32>,
    %32 = vector.shape_cast %29 : vector<8x1xf32> to vector<8x1xf32>
    %33 = vector.broadcast %32 : vector<8x1xf32> to vector<8x8xf32>
    %c0_21 = arith.constant 0 : index
    %c0_22 = arith.constant 0 : index
    %34 = vector.load %arg9[%c0_21, %c0_22] : memref<8x8xf32, #tpu.memory_space<vmem>>, vector<8x8xf32>
    tpu.vector_store %arg9[%c0_21, %c0_22], %33 {strides = array<i32>} : memref<8x8xf32, #tpu.memory_space<vmem>>, vector<8x8xf32>,
    return
  }
  func.func @transform_0(%arg0: i32) -> (i32, i32) {
    %c0_i32 = arith.constant 0 : i32
    %c0_i32_0 = arith.constant 0 : i32
    return %arg0, %c0_i32 : i32, i32
  }
  func.func @transform_1(%arg0: i32) -> (i32, i32) {
    %c0_i32 = arith.constant 0 : i32
    %c0_i32_0 = arith.constant 0 : i32
    %c0_i32_1 = arith.constant 0 : i32
    return %c0_i32, %c0_i32_0 : i32, i32
  }
  func.func @transform_2(%arg0: i32) -> (i32, i32) {
    %c0_i32 = arith.constant 0 : i32
    %c0_i32_0 = arith.constant 0 : i32
    %c0_i32_1 = arith.constant 0 : i32
    return %c0_i32, %c0_i32_0 : i32, i32
  }
  func.func @transform_3(%arg0: i32) -> (i32, i32) {
    %c0_i32 = arith.constant 0 : i32
    %c0_i32_0 = arith.constant 0 : i32
    %c0_i32_1 = arith.constant 0 : i32
    return %c0_i32, %c0_i32_0 : i32, i32
  }
  func.func @transform_4(%arg0: i32) -> (i32, i32) {
    %c0_i32 = arith.constant 0 : i32
    %c0_i32_0 = arith.constant 0 : i32
    %c0_i32_1 = arith.constant 0 : i32
    return %c0_i32, %c0_i32_0 : i32, i32
  }
  func.func @transform_5(%arg0: i32) -> (i32, i32) {
    %c0_i32 = arith.constant 0 : i32
    %c0_i32_0 = arith.constant 0 : i32
    %c0_i32_1 = arith.constant 0 : i32
    return %c0_i32, %c0_i32_0 : i32, i32
  }
  func.func @transform_6(%arg0: i32) -> (i32, i32) {
    %c0_i32 = arith.constant 0 : i32
    %c0_i32_0 = arith.constant 0 : i32
    %c0_i32_1 = arith.constant 0 : i32
    return %c0_i32, %c0_i32_0 : i32, i32
  }
  func.func @transform_7(%arg0: i32) -> (i32, i32) {
    %c0_i32 = arith.constant 0 : i32
    %c0_i32_0 = arith.constant 0 : i32
    return %arg0, %c0_i32 : i32, i32
  }
  func.func @transform_8(%arg0: i32) -> (i32, i32) {
    %c0_i32 = arith.constant 0 : i32
    %c0_i32_0 = arith.constant 0 : i32
    return %arg0, %c0_i32 : i32, i32
  }
}

</mosaic_0001>

<llo_original>
// kernel: coupling_layer.1
$region0: #{coupling_layer.1}
  #allocation0 [shape = 'u32[]', space=smem, size = 0x4, offset = 0x4, fixed_abs, tag = 'smem constant byte address 0x4 - core index']
  #allocation1 [shape = 'u32[144,128]{1,0:T(1,128)}', space=vmem, size = 0x12000, scoped, tag = 'internal scratch']
  %s0 = inlined_call_operand.vmem [shape: f32[8,256], index: 0, kind: input, shape index: {}]
  %s1 = inlined_call_operand.hbm [shape: f32[128,128], index: 1, kind: input, shape index: {}]
  %s2 = inlined_call_operand.vmem [shape: f32[1,128], index: 2, kind: input, shape index: {}]
  %s3 = inlined_call_operand.hbm [shape: f32[128,128], index: 3, kind: input, shape index: {}]
  %s4 = inlined_call_operand.vmem [shape: f32[1,128], index: 4, kind: input, shape index: {}]
  %s5 = inlined_call_operand.hbm [shape: f32[128,256], index: 5, kind: input, shape index: {}]
  %s6 = inlined_call_operand.vmem [shape: f32[1,256], index: 6, kind: input, shape index: {}]
  %s7 = inlined_call_operand.vmem [shape: f32[8,256], index: 7, kind: output, shape index: {0}]
  %s8 = inlined_call_operand.vmem [shape: f32[8,8], index: 8, kind: output, shape index: {1}]
  %9 = xla_tuple %s7, %s8
  %s10 = sld [smem:[#allocation0]]
  $region58: #{coupling_layer.1} parent=0
    _
  %s12 = ssub.s32 1, %s10
  %s13 = scalar_select 0, %s12, %s10
  $region1: #{coupling_layer.1} parent=0
    #allocation2 [shape = 'u8[65536]{0}', space=vmem, size = 0x10000, scoped, tag = 'input window, operand 1, single buffered']
    #allocation3 [shape = 's32[1]{0}', space=sflag, size = 0x4, scoped, tag = 'scoped memory for coupling_layer.1']
    #allocation4 [shape = 'u8[65536]{0}', space=vmem, size = 0x10000, scoped, tag = 'input window, operand 3, single buffered']
    #allocation5 [shape = 's32[1]{0}', space=sflag, size = 0x4, scoped, tag = 'scoped memory for coupling_layer.1']
    #allocation6 [shape = 'u8[131072]{0}', space=vmem, size = 0x20000, scoped, tag = 'input window, operand 5, single buffered']
    %14 = vsyncpa [#allocation3], 0
    %15 = vsyncpa [#allocation5], 0
    // Predicated region
    $region2: #{coupling_layer.1} parent=1 // pred_check
      _
    $region3: #{coupling_layer.1} parent=1 // pred_check_branch
      %17 = sbr.rel (0) target = $region5
    $region4: #{coupling_layer.1} parent=1 // pred_region
      _
    $region5: #{coupling_layer.1} parent=1 // pred_fallthru
      _
    // Predicated region
    $region6: #{coupling_layer.1} parent=1 // pred_check
      _
    $region7: #{coupling_layer.1} parent=1 // pred_check_branch
      %19 = sbr.rel (0) target = $region9
    $region8: #{coupling_layer.1} parent=1 // pred_region
      %s21 = ssub.s32 2048, 2048
      %22 = vsyncadd [#allocation3], %s21
      %s23 = sshll.u32 [#allocation2], 4
      %s24 = int_to_ptr.vmem [resolvable:$true] %s23
      %29 = dma.hbm_to_vmem [thread:$0]  %s1, 2048, %s24, [#allocation3], 128, 128, 8
    $region9: #{coupling_layer.1} parent=1 // pred_fallthru
      _
    // Predicated region
    $region10: #{coupling_layer.1} parent=1 // pred_check
      _
    $region11: #{coupling_layer.1} parent=1 // pred_check_branch
      %31 = sbr.rel (0) target = $region13
    $region12: #{coupling_layer.1} parent=1 // pred_region
      _
    $region13: #{coupling_layer.1} parent=1 // pred_fallthru
      _
    // Predicated region
    $region14: #{coupling_layer.1} parent=1 // pred_check
      _
    $region15: #{coupling_layer.1} parent=1 // pred_check_branch
      %33 = sbr.rel (0) target = $region17
    $region16: #{coupling_layer.1} parent=1 // pred_region
      %s35 = ssub.s32 2048, 2048
      %36 = vsyncadd [#allocation5], %s35
      %s37 = sshll.u32 [#allocation4], 4
      %s38 = int_to_ptr.vmem [resolvable:$true] %s37
      %43 = dma.hbm_to_vmem [thread:$0]  %s3, 2048, %s38, [#allocation5], 128, 128, 8
    $region17: #{coupling_layer.1} parent=1 // pred_fallthru
      _
    // Predicated region
    $region18: #{coupling_layer.1} parent=1 // pred_check
      _
    $region19: #{coupling_layer.1} parent=1 // pred_check_branch
      %45 = sbr.rel (0) target = $region21
    $region20: #{coupling_layer.1} parent=1 // pred_region
      _
    $region21: #{coupling_layer.1} parent=1 // pred_fallthru
      _
    // Predicated region
    $region22: #{coupling_layer.1} parent=1 // pred_check
      _
    $region23: #{coupling_layer.1} parent=1 // pred_check_branch
      %47 = sbr.rel (0) target = $region25
    $region24: #{coupling_layer.1} parent=1 // pred_region
      %s49 = ssub.s32 4096, 4096
      %50 = vsyncadd [#allocation5], %s49
      %s51 = sshll.u32 [#allocation6], 4
      %s52 = int_to_ptr.vmem [resolvable:$true] %s51
      %57 = dma.hbm_to_vmem [thread:$0]  %s5, 4096, %s52, [#allocation5], 256, 256, 16
    $region25: #{coupling_layer.1} parent=1 // pred_fallthru
      _
    // Predicated region
    $region26: #{coupling_layer.1} parent=1 // pred_check
      _
    $region27: #{coupling_layer.1} parent=1 // pred_check_branch
      %59 = sbr.rel (0) target = $region29
    $region28: #{coupling_layer.1} parent=1 // pred_region
      _
    $region29: #{coupling_layer.1} parent=1 // pred_fallthru
      _
    // Predicated region
    $region30: #{coupling_layer.1} parent=1 // pred_check
      _
    $region31: #{coupling_layer.1} parent=1 // pred_check_branch
      %61 = sbr.rel (0) target = $region33
    $region32: #{coupling_layer.1} parent=1 // pred_region
      %62 = dma.done [#allocation3], 2048
    $region33: #{coupling_layer.1} parent=1 // pred_fallthru
      _
    // Predicated region
    $region34: #{coupling_layer.1} parent=1 // pred_check
      _
    $region35: #{coupling_layer.1} parent=1 // pred_check_branch
      %64 = sbr.rel (0) target = $region37
    $region36: #{coupling_layer.1} parent=1 // pred_region
      %65 = dma.done [#allocation5], 2048
    $region37: #{coupling_layer.1} parent=1 // pred_fallthru
      _
    // Predicated region
    $region38: #{coupling_layer.1} parent=1 // pred_check
      _
    $region39: #{coupling_layer.1} parent=1 // pred_check_branch
      %67 = sbr.rel (0) target = $region41
    $region40: #{coupling_layer.1} parent=1 // pred_region
      %68 = dma.done [#allocation5], 4096
    $region41: #{coupling_layer.1} parent=1 // pred_fallthru
      _
    %v69 = vld [vmem:[%s0] sm:$0xff]
    %v70 = vld [vmem:[%s0 + $0x8] sm:$0xff]
    %v71 = vld [vmem:[#allocation2] sm:$0xff]
    %v72 = vld [vmem:[#allocation2 + $0x8] sm:$0xff]
    %v73 = vld [vmem:[#allocation2 + $0x10] sm:$0xff]
    %v74 = vld [vmem:[#allocation2 + $0x18] sm:$0xff]
    %v75 = vld [vmem:[#allocation2 + $0x20] sm:$0xff]
    %v76 = vld [vmem:[#allocation2 + $0x28] sm:$0xff]
    %v77 = vld [vmem:[#allocation2 + $0x30] sm:$0xff]
    %v78 = vld [vmem:[#allocation2 + $0x38] sm:$0xff]
    %v79 = vld [vmem:[#allocation2 + $0x40] sm:$0xff]
    %v80 = vld [vmem:[#allocation2 + $0x48] sm:$0xff]
    %v81 = vld [vmem:[#allocation2 + $0x50] sm:$0xff]
    %v82 = vld [vmem:[#allocation2 + $0x58] sm:$0xff]
    %v83 = vld [vmem:[#allocation2 + $0x60] sm:$0xff]
    %v84 = vld [vmem:[#allocation2 + $0x68] sm:$0xff]
    %v85 = vld [vmem:[#allocation2 + $0x70] sm:$0xff]
    %v86 = vld [vmem:[#allocation2 + $0x78] sm:$0xff]
    %v87 = vld [vmem:[%s2] sm:$0x1]
    %v89 = vlaneseq
    %v90 = vshrl.u32 %v89, 7
    %v91 = vsub.s32 0, %v90
    %v92 = vrot.slane %v87, %v91
    %94 = vmatprep.subr.mxu0 0.0
    %95 = vmatpush1.msra.mxu0 %v71
    %96 = vmatprep.subr.mxu0 0.0
    %97 = vmatpush1.msra.mxu0 %v72
    %98 = vmatprep.subr.mxu0 0.0
    %99 = vmatpush1.msra.mxu0 %v73
    %100 = vmatprep.subr.mxu0 0.0
    %101 = vmatpush1.msra.mxu0 %v74
    %102 = vmatprep.subr.mxu0 0.0
    %103 = vmatpush1.msra.mxu0 %v75
    %104 = vmatprep.subr.mxu0 0.0
    %105 = vmatpush1.msra.mxu0 %v76
    %106 = vmatprep.subr.mxu0 0.0
    %107 = vmatpush1.msra.mxu0 %v77
    %108 = vmatprep.subr.mxu0 0.0
    %109 = vmatpush1.msra.mxu0 %v78
    %110 = vmatprep.subr.mxu0 0.0
    %111 = vmatpush1.msra.mxu0 %v79
    %112 = vmatprep.subr.mxu0 0.0
    %113 = vmatpush1.msra.mxu0 %v80
    %114 = vmatprep.subr.mxu0 0.0
    %115 = vmatpush1.msra.mxu0 %v81
    %116 = vmatprep.subr.mxu0 0.0
    %117 = vmatpush1.msra.mxu0 %v82
    %118 = vmatprep.subr.mxu0 0.0
    %119 = vmatpush1.msra.mxu0 %v83
    %120 = vmatprep.subr.mxu0 0.0
    %121 = vmatpush1.msra.mxu0 %v84
    %122 = vmatprep.subr.mxu0 0.0
    %123 = vmatpush1.msra.mxu0 %v85
    %124 = vmatprep.subr.mxu0 0.0
    %125 = vmatpush1.msra.mxu0 %v86
    %126 = vmatprep.subr.mxu0 0.0
    %127 = vmatpush1.msra.mxu0 0.0
    %128 = vmatprep.subr.mxu0 0.0
    %129 = vmatpush1.msra.mxu0 0.0
    %130 = vmatprep.subr.mxu0 0.0
    %131 = vmatpush1.msra.mxu0 0.0
    %132 = vmatprep.subr.mxu0 0.0
    %133 = vmatpush1.msra.mxu0 0.0
    %134 = vmatprep.subr.mxu0 0.0
    %135 = vmatpush1.msra.mxu0 0.0
    %136 = vmatprep.subr.mxu0 0.0
    %137 = vmatpush1.msra.mxu0 0.0
    %138 = vmatprep.subr.mxu0 0.0
    %139 = vmatpush1.msra.mxu0 0.0
    %140 = vmatprep.subr.mxu0 0.0
    %141 = vmatpush1.msra.mxu0 0.0
    %142 = vmatprep.subr.mxu0 0.0
    %143 = vmatpush1.msra.mxu0 0.0
    %144 = vmatprep.subr.mxu0 0.0
    %145 = vmatpush1.msra.mxu0 0.0
    %146 = vmatprep.subr.mxu0 0.0
    %147 = vmatpush1.msra.mxu0 0.0
    %148 = vmatprep.subr.mxu0 0.0
    %149 = vmatpush1.msra.mxu0 0.0
    %150 = vmatprep.subr.mxu0 0.0
    %151 = vmatpush1.msra.mxu0 0.0
    %152 = vmatprep.subr.mxu0 0.0
    %153 = vmatpush1.msra.mxu0 0.0
    %154 = vmatprep.subr.mxu0 0.0
    %155 = vmatpush1.msra.mxu0 0.0
    %156 = vmatprep.subr.mxu0 0.0
    %157 = vmatpush1.msra.mxu0 0.0
    %158 = vmatprep.mubr.f32.mxu0 0.0
    %159 = vmatmul.mubr.f32.gmra.mrb[0].mxu0 %v69
    %v160 = vpop.f32.mrb[0].mxu0
    %v161 = vadd.f32 %v92, %v160
    %v162 = vpop.f32.mrb[0].mxu0
    %163 = vdwg.mxu0
    %v164 = vmax.f32 %v161, 0.0
    %v165 = vld [vmem:[#allocation4] sm:$0xff]
    %v166 = vld [vmem:[#allocation4 + $0x8] sm:$0xff]
    %v167 = vld [vmem:[#allocation4 + $0x10] sm:$0xff]
    %v168 = vld [vmem:[#allocation4 + $0x18] sm:$0xff]
    %v169 = vld [vmem:[#allocation4 + $0x20] sm:$0xff]
    %v170 = vld [vmem:[#allocation4 + $0x28] sm:$0xff]
    %v171 = vld [vmem:[#allocation4 + $0x30] sm:$0xff]
    %v172 = vld [vmem:[#allocation4 + $0x38] sm:$0xff]
    %v173 = vld [vmem:[#allocation4 + $0x40] sm:$0xff]
    %v174 = vld [vmem:[#allocation4 + $0x48] sm:$0xff]
    %v175 = vld [vmem:[#allocation4 + $0x50] sm:$0xff]
    %v176 = vld [vmem:[#allocation4 + $0x58] sm:$0xff]
    %v177 = vld [vmem:[#allocation4 + $0x60] sm:$0xff]
    %v178 = vld [vmem:[#allocation4 + $0x68] sm:$0xff]
    %v179 = vld [vmem:[#allocation4 + $0x70] sm:$0xff]
    %v180 = vld [vmem:[#allocation4 + $0x78] sm:$0xff]
    %v181 = vld [vmem:[%s4] sm:$0x1]
    %v183 = vlaneseq
    %v184 = vshrl.u32 %v183, 7
    %v185 = vsub.s32 0, %v184
    %v186 = vrot.slane %v181, %v185
    %188 = vmatprep.subr.mxu0 0.0
    %189 = vmatpush1.msra.mxu0 %v165
    %190 = vmatprep.subr.mxu0 0.0
    %191 = vmatpush1.msra.mxu0 %v166
    %192 = vmatprep.subr.mxu0 0.0
    %193 = vmatpush1.msra.mxu0 %v167
    %194 = vmatprep.subr.mxu0 0.0
    %195 = vmatpush1.msra.mxu0 %v168
    %196 = vmatprep.subr.mxu0 0.0
    %197 = vmatpush1.msra.mxu0 %v169
    %198 = vmatprep.subr.mxu0 0.0
    %199 = vmatpush1.msra.mxu0 %v170
    %200 = vmatprep.subr.mxu0 0.0
    %201 = vmatpush1.msra.mxu0 %v171
    %202 = vmatprep.subr.mxu0 0.0
    %203 = vmatpush1.msra.mxu0 %v172
    %204 = vmatprep.subr.mxu0 0.0
    %205 = vmatpush1.msra.mxu0 %v173
    %206 = vmatprep.subr.mxu0 0.0
    %207 = vmatpush1.msra.mxu0 %v174
    %208 = vmatprep.subr.mxu0 0.0
    %209 = vmatpush1.msra.mxu0 %v175
    %210 = vmatprep.subr.mxu0 0.0
    %211 = vmatpush1.msra.mxu0 %v176
    %212 = vmatprep.subr.mxu0 0.0
    %213 = vmatpush1.msra.mxu0 %v177
    %214 = vmatprep.subr.mxu0 0.0
    %215 = vmatpush1.msra.mxu0 %v178
    %216 = vmatprep.subr.mxu0 0.0
    %217 = vmatpush1.msra.mxu0 %v179
    %218 = vmatprep.subr.mxu0 0.0
    %219 = vmatpush1.msra.mxu0 %v180
    %220 = vmatprep.subr.mxu0 0.0
    %221 = vmatpush1.msra.mxu0 0.0
    %222 = vmatprep.subr.mxu0 0.0
    %223 = vmatpush1.msra.mxu0 0.0
    %224 = vmatprep.subr.mxu0 0.0
    %225 = vmatpush1.msra.mxu0 0.0
    %226 = vmatprep.subr.mxu0 0.0
    %227 = vmatpush1.msra.mxu0 0.0
    %228 = vmatprep.subr.mxu0 0.0
    %229 = vmatpush1.msra.mxu0 0.0
    %230 = vmatprep.subr.mxu0 0.0
    %231 = vmatpush1.msra.mxu0 0.0
    %232 = vmatprep.subr.mxu0 0.0
    %233 = vmatpush1.msra.mxu0 0.0
    %234 = vmatprep.subr.mxu0 0.0
    %235 = vmatpush1.msra.mxu0 0.0
    %236 = vmatprep.subr.mxu0 0.0
    %237 = vmatpush1.msra.mxu0 0.0
    %238 = vmatprep.subr.mxu0 0.0
    %239 = vmatpush1.msra.mxu0 0.0
    %240 = vmatprep.subr.mxu0 0.0
    %241 = vmatpush1.msra.mxu0 0.0
    %242 = vmatprep.subr.mxu0 0.0
    %243 = vmatpush1.msra.mxu0 0.0
    %244 = vmatprep.subr.mxu0 0.0
    %245 = vmatpush1.msra.mxu0 0.0
    %246 = vmatprep.subr.mxu0 0.0
    %247 = vmatpush1.msra.mxu0 0.0
    %248 = vmatprep.subr.mxu0 0.0
    %249 = vmatpush1.msra.mxu0 0.0
    %250 = vmatprep.subr.mxu0 0.0
    %251 = vmatpush1.msra.mxu0 0.0
    %252 = vmatprep.mubr.f32.mxu0 0.0
    %253 = vmatmul.mubr.f32.gmra.mrb[0].mxu0 %v164
    %v254 = vpop.f32.mrb[0].mxu0
    %v255 = vadd.f32 %v186, %v254
    %v256 = vpop.f32.mrb[0].mxu0
    %257 = vdwg.mxu0
    %v258 = vmax.f32 %v255, 0.0
    %v259 = vld [vmem:[#allocation6] sm:$0xff]
    %v260 = vld [vmem:[#allocation6 + $0x8] sm:$0xff]
    %v261 = vld [vmem:[#allocation6 + $0x10] sm:$0xff]
    %v262 = vld [vmem:[#allocation6 + $0x18] sm:$0xff]
    %v263 = vld [vmem:[#allocation6 + $0x20] sm:$0xff]
    %v264 = vld [vmem:[#allocation6 + $0x28] sm:$0xff]
    %v265 = vld [vmem:[#allocation6 + $0x30] sm:$0xff]
    %v266 = vld [vmem:[#allocation6 + $0x38] sm:$0xff]
    %v267 = vld [vmem:[#allocation6 + $0x40] sm:$0xff]
    %v268 = vld [vmem:[#allocation6 + $0x48] sm:$0xff]
    %v269 = vld [vmem:[#allocation6 + $0x50] sm:$0xff]
    %v270 = vld [vmem:[#allocation6 + $0x58] sm:$0xff]
    %v271 = vld [vmem:[#allocation6 + $0x60] sm:$0xff]
    %v272 = vld [vmem:[#allocation6 + $0x68] sm:$0xff]
    %v273 = vld [vmem:[#allocation6 + $0x70] sm:$0xff]
    %v274 = vld [vmem:[#allocation6 + $0x78] sm:$0xff]
    %v275 = vld [vmem:[#allocation6 + $0x80] sm:$0xff]
    %v276 = vld [vmem:[#allocation6 + $0x88] sm:$0xff]
    %v277 = vld [vmem:[#allocation6 + $0x90] sm:$0xff]
    %v278 = vld [vmem:[#allocation6 + $0x98] sm:$0xff]
    %v279 = vld [vmem:[#allocation6 + $0xa0] sm:$0xff]
    %v280 = vld [vmem:[#allocation6 + $0xa8] sm:$0xff]
    %v281 = vld [vmem:[#allocation6 + $0xb0] sm:$0xff]
    %v282 = vld [vmem:[#allocation6 + $0xb8] sm:$0xff]
    %v283 = vld [vmem:[#allocation6 + $0xc0] sm:$0xff]
    %v284 = vld [vmem:[#allocation6 + $0xc8] sm:$0xff]
    %v285 = vld [vmem:[#allocation6 + $0xd0] sm:$0xff]
    %v286 = vld [vmem:[#allocation6 + $0xd8] sm:$0xff]
    %v287 = vld [vmem:[#allocation6 + $0xe0] sm:$0xff]
    %v288 = vld [vmem:[#allocation6 + $0xe8] sm:$0xff]
    %v289 = vld [vmem:[#allocation6 + $0xf0] sm:$0xff]
    %v290 = vld [vmem:[#allocation6 + $0xf8] sm:$0xff]
    %v291 = vld [vmem:[%s6] sm:$0x3]
    %v293 = vlaneseq
    %v294 = vshrl.u32 %v293, 7
    %v295 = vsub.s32 0, %v294
    %v296 = vrot.slane %v291, %v295
    %v297 = vlaneseq
    %v298 = vshrl.u32 %v297, 7
    %v299 = vsub.s32 1, %v298
    %v300 = vrot.slane %v291, %v299
    %303 = vmatprep.subr.mxu0 %v260
    %304 = vmatpush1.msra.mxu0 %v259
    %305 = vmatprep.subr.mxu0 %v262
    %306 = vmatpush1.msra.mxu0 %v261
    %307 = vmatprep.subr.mxu0 %v264
    %308 = vmatpush1.msra.mxu0 %v263
    %309 = vmatprep.subr.mxu0 %v266
    %310 = vmatpush1.msra.mxu0 %v265
    %311 = vmatprep.subr.mxu0 %v268
    %312 = vmatpush1.msra.mxu0 %v267
    %313 = vmatprep.subr.mxu0 %v270
    %314 = vmatpush1.msra.mxu0 %v269
    %315 = vmatprep.subr.mxu0 %v272
    %316 = vmatpush1.msra.mxu0 %v271
    %317 = vmatprep.subr.mxu0 %v274
    %318 = vmatpush1.msra.mxu0 %v273
    %319 = vmatprep.subr.mxu0 %v276
    %320 = vmatpush1.msra.mxu0 %v275
    %321 = vmatprep.subr.mxu0 %v278
    %322 = vmatpush1.msra.mxu0 %v277
    %323 = vmatprep.subr.mxu0 %v280
    %324 = vmatpush1.msra.mxu0 %v279
    %325 = vmatprep.subr.mxu0 %v282
    %326 = vmatpush1.msra.mxu0 %v281
    %327 = vmatprep.subr.mxu0 %v284
    %328 = vmatpush1.msra.mxu0 %v283
    %329 = vmatprep.subr.mxu0 %v286
    %330 = vmatpush1.msra.mxu0 %v285
    %331 = vmatprep.subr.mxu0 %v288
    %332 = vmatpush1.msra.mxu0 %v287
    %333 = vmatprep.subr.mxu0 %v290
    %334 = vmatpush1.msra.mxu0 %v289
    %335 = vmatprep.subr.mxu0 0.0
    %336 = vmatpush1.msra.mxu0 0.0
    %337 = vmatprep.subr.mxu0 0.0
    %338 = vmatpush1.msra.mxu0 0.0
    %339 = vmatprep.subr.mxu0 0.0
    %340 = vmatpush1.msra.mxu0 0.0
    %341 = vmatprep.subr.mxu0 0.0
    %342 = vmatpush1.msra.mxu0 0.0
    %343 = vmatprep.subr.mxu0 0.0
    %344 = vmatpush1.msra.mxu0 0.0
    %345 = vmatprep.subr.mxu0 0.0
    %346 = vmatpush1.msra.mxu0 0.0
    %347 = vmatprep.subr.mxu0 0.0
    %348 = vmatpush1.msra.mxu0 0.0
    %349 = vmatprep.subr.mxu0 0.0
    %350 = vmatpush1.msra.mxu0 0.0
    %351 = vmatprep.subr.mxu0 0.0
    %352 = vmatpush1.msra.mxu0 0.0
    %353 = vmatprep.subr.mxu0 0.0
    %354 = vmatpush1.msra.mxu0 0.0
    %355 = vmatprep.subr.mxu0 0.0
    %356 = vmatpush1.msra.mxu0 0.0
    %357 = vmatprep.subr.mxu0 0.0
    %358 = vmatpush1.msra.mxu0 0.0
    %359 = vmatprep.subr.mxu0 0.0
    %360 = vmatpush1.msra.mxu0 0.0
    %361 = vmatprep.subr.mxu0 0.0
    %362 = vmatpush1.msra.mxu0 0.0
    %363 = vmatprep.subr.mxu0 0.0
    %364 = vmatpush1.msra.mxu0 0.0
    %365 = vmatprep.subr.mxu0 0.0
    %366 = vmatpush1.msra.mxu0 0.0
    %367 = vmatprep.mubr.f32.mxu0 0.0
    %368 = vmatmul.mubr.f32.gmra.mrb[0].mxu0 %v258
    %v369 = vpop.f32.mrb[0].mxu0
    %v370 = vadd.f32 %v296, %v369
    %v371 = vpop.f32.mrb[0].mxu0
    %v372 = vadd.f32 %v300, %v371
    %373 = vdwg.mxu0
    %v374 = vtanh.pop %v370
    %v375 = vmul.f32 %v374, 1.442695
    %v376 = vpow.pop %v375
    %v377 = vmul.f32 %v70, %v376
    %v378 = vadd.f32 %v377, %v372
    %379 = vadd.xlane.f32.xlu0 %v374
    %v380 = vpop.xlane.xlu0 %379
    %381 = vst [vmem:[%s7] sm:$0xff] %v69
    %382 = vst [vmem:[%s7 + $0x8] sm:$0xff] %v378
    %vm383 = vcmask 64512
    %384 = vst.msk [vmem:[%s8] sm:$0xff] %vm383, %v380
    // Predicated region
    $region42: #{coupling_layer.1} parent=1 // pred_check
      _
    $region43: #{coupling_layer.1} parent=1 // pred_check_branch
      %386 = sbr.rel (0) target = $region45
    $region44: #{coupling_layer.1} parent=1 // pred_region
      _
    $region45: #{coupling_layer.1} parent=1 // pred_fallthru
      _
    // Predicated region
    $region46: #{coupling_layer.1} parent=1 // pred_check
      _
    $region47: #{coupling_layer.1} parent=1 // pred_check_branch
      %388 = sbr.rel (0) target = $region49
    $region48: #{coupling_layer.1} parent=1 // pred_region
      _
    $region49: #{coupling_layer.1} parent=1 // pred_fallthru
      _
    // Predicated region
    $region50: #{coupling_layer.1} parent=1 // pred_check
      _
    $region51: #{coupling_layer.1} parent=1 // pred_check_branch
      %390 = sbr.rel (0) target = $region53
    $region52: #{coupling_layer.1} parent=1 // pred_region
      _
    $region53: #{coupling_layer.1} parent=1 // pred_fallthru
      _
    // Predicated region
    $region54: #{coupling_layer.1} parent=1 // pred_check
      _
    $region55: #{coupling_layer.1} parent=1 // pred_check_branch
      %392 = sbr.rel (0) target = $region57
    $region56: #{coupling_layer.1} parent=1 // pred_region
      _
    $region57: #{coupling_layer.1} parent=1 // pred_fallthru
      _
    %393 = vsyncpa [#allocation3], 1
    %394 = vsyncpa [#allocation5], 1

</llo_original>
